<compile_context>
chip_gen: v5e
topology: v5e:2x2
jax: 0.10.0
libtpu: 0.0.40
codegen_flags: <defaults>
</compile_context>

<pallas_src>
import jax
import jax.numpy as jnp
from jax.experimental import pallas as pl
from jax.experimental.pallas import tpu as pltpu


def _round_up(x, m):
    return ((x + m - 1) // m) * m


def _dyn_mlp_kernel(x_ref, w1_ref, b1_ref, w2_ref, b2_ref, w3_ref, b3_ref,
                    out_ref):
    # x:  (TM, S+A)            w1: (S+A, Hp)   b1: (1, Hp)
    # w2: (Hp, Hp)             b2: (1, Hp)
    # w3: (Hp, OP)             b3: (1, OP)     out: (TM, OP)   (OP = 128)
    h = jnp.dot(x_ref[...], w1_ref[...], preferred_element_type=jnp.float32)
    h = jnp.maximum(h + b1_ref[...], 0.0)

    h = jnp.dot(h.astype(w2_ref.dtype), w2_ref[...],
                preferred_element_type=jnp.float32)
    h = jnp.maximum(h + b2_ref[...], 0.0)

    y = jnp.dot(h.astype(w3_ref.dtype), w3_ref[...],
                preferred_element_type=jnp.float32)
    out_ref[...] = (y + b3_ref[...]).astype(out_ref.dtype)


class AbsoluteDynamicsModelPallas:
    """JAX/Pallas port of the PyTorch AbsoluteDynamicsModel."""

    H = 100          # hidden width (as in the PyTorch module)
    HP = 128         # lane-padded hidden width (compile-time constant)

    def __init__(self, state_dim, action_dim, key, tm_max=256, use_bf16=False):
        self.state_dim = int(state_dim)
        self.action_dim = int(action_dim)
        self.input_dim = self.state_dim + self.action_dim
        self._tm_max = int(tm_max)
        self._mxu_dtype = jnp.bfloat16 if use_bf16 else jnp.float32
        self.OUT_P = _round_up(self.state_dim, 128)   # lane-dense output width

        k = jax.random.split(key, 6)

        def _linear_init(kw, kb, fan_in, fan_out):
            # PyTorch nn.Linear default init: U(-1/sqrt(fan_in), 1/sqrt(fan_in))
            bound = 1.0 / jnp.sqrt(jnp.float32(fan_in))
            w = jax.random.uniform(kw, (fan_in, fan_out), jnp.float32, -bound, bound)
            b = jax.random.uniform(kb, (fan_out,), jnp.float32, -bound, bound)
            return w, b

        W1, b1 = _linear_init(k[0], k[1], self.input_dim, self.H)
        W2, b2 = _linear_init(k[2], k[3], self.H, self.H)
        W3, b3 = _linear_init(k[4], k[5], self.H, self.state_dim)

        # Unpadded copies (reference / export).
        self.W1, self.b1 = W1, b1
        self.W2, self.b2 = W2, b2
        self.W3, self.b3 = W3, b3

        Hp, Op = self.HP, self.OUT_P
        pad_h = Hp - self.H
        pad_o = Op - self.state_dim
        dt = self._mxu_dtype
        # Zero padding of hidden/output lanes is exact (contributes 0 through
        # relu and the next matmul; padded output cols are sliced off).
        self._W1 = jnp.pad(W1, ((0, 0), (0, pad_h))).astype(dt)          # (S+A, Hp)
        self._b1 = jnp.pad(b1, (0, pad_h)).reshape(1, Hp)                # f32
        self._W2 = jnp.pad(W2, ((0, pad_h), (0, pad_h))).astype(dt)      # (Hp, Hp)
        self._b2 = jnp.pad(b2, (0, pad_h)).reshape(1, Hp)                # f32
        self._W3 = jnp.pad(W3, ((0, pad_h), (0, pad_o))).astype(dt)      # (Hp, Op)
        self._b3 = jnp.pad(b3, (0, pad_o)).reshape(1, Op)                # f32

    def _choose_tile(self, B):
        """Batch tile: multiple of 8, <= tm_max, evenly dividing the padded
        batch, and >= 2 grid steps when B >= 16 (v7x megacore sharding)."""
        if B <= 8:
            return 8
        n_tiles = pl.cdiv(B, self._tm_max)
        if B >= 16:
            n_tiles = max(n_tiles, 2)
        return _round_up(pl.cdiv(B, n_tiles), 8)

    def __call__(self, state, action):
        assert state.shape[:-1] == action.shape[:-1]
        assert state.shape[-1] == self.state_dim
        assert action.shape[-1] == self.action_dim

        lead = state.shape[:-1]
        # Fused layer-1 input: a (B, S+A) concat in the wrapper is negligible
        # XLA cost and halves the layer-1 MXU chains / input DMAs.
        x = jnp.concatenate(
            [state.reshape(-1, self.state_dim),
             action.reshape(-1, self.action_dim)],
            axis=-1).astype(self._mxu_dtype)
        B = x.shape[0]

        tm = self._choose_tile(B)
        Bp = _round_up(B, tm)
        if Bp != B:
            x = jnp.pad(x, ((0, Bp - B), (0, 0)))

        K, Hp, Op = self.input_dim, self.HP, self.OUT_P
        grid = (Bp // tm,)

        out = pl.pallas_call(
            _dyn_mlp_kernel,
            out_shape=jax.ShapeDtypeStruct((Bp, Op), jnp.float32),
            grid_spec=pltpu.PrefetchScalarGridSpec(
                num_scalar_prefetch=0,
                grid=grid,
                in_specs=[
                    pl.BlockSpec((tm, K), lambda i: (i, 0)),    # x tile
                    pl.BlockSpec((K, Hp), lambda i: (0, 0)),    # W1
                    pl.BlockSpec((1, Hp), lambda i: (0, 0)),    # b1
                    pl.BlockSpec((Hp, Hp), lambda i: (0, 0)),   # W2
                    pl.BlockSpec((1, Hp), lambda i: (0, 0)),    # b2
                    pl.BlockSpec((Hp, Op), lambda i: (0, 0)),   # W3 (lane-padded)
                    pl.BlockSpec((1, Op), lambda i: (0, 0)),    # b3 (lane-padded)
                ],
                out_specs=pl.BlockSpec((tm, Op), lambda i: (i, 0)),
            ),
            compiler_params=pltpu.CompilerParams(
                dimension_semantics=("parallel",)),
        )(x, self._W1, self._b1, self._W2, self._b2, self._W3, self._b3)

        # Strip batch padding and padded output lanes before callers see it.
        return out[:B, :self.state_dim].reshape(*lead, self.state_dim)


def _reference_forward(state, action, model):
    x = jnp.concatenate([state, action], axis=-1).astype(jnp.float32)
    h = jnp.maximum(x @ model.W1 + model.b1, 0.0)
    h = jnp.maximum(h @ model.W2 + model.b2, 0.0)
    return h @ model.W3 + model.b3


if __name__ == "__main__":
    key = jax.random.PRNGKey(0)
    k_model, k_s, k_a = jax.random.split(key, 3)

    state_dim, action_dim = 3, 3   # SE(2) pose [x, y, theta] + planar push action
    B = 24                         # small, but exercises multi-tile grid + padding

    model = AbsoluteDynamicsModelPallas(state_dim, action_dim, k_model)

    state = jax.random.normal(k_s, (B, state_dim), dtype=jnp.float32)
    action = jax.random.normal(k_a, (B, action_dim), dtype=jnp.float32)

    next_state = model(state, action)
    next_state = jax.block_until_ready(next_state)

    ref = _reference_forward(state, action, model)
    assert next_state.shape == (B, state_dim), next_state.shape
    assert jnp.allclose(next_state, ref, rtol=1e-4, atol=1e-5), (
        jnp.max(jnp.abs(next_state - ref)))

    print("KERNEL_OK")
</pallas_src>

<mosaic_0001>
module attributes {stable_mosaic.version = 11 : i64} {
  func.func @_dyn_mlp_kernel(%arg0: i32, %arg1: memref<16x6xf32, #tpu.memory_space<vmem>>, %arg2: memref<6x128xf32, #tpu.memory_space<vmem>>, %arg3: memref<1x128xf32, #tpu.memory_space<vmem>>, %arg4: memref<128x128xf32, #tpu.memory_space<vmem>>, %arg5: memref<1x128xf32, #tpu.memory_space<vmem>>, %arg6: memref<128x128xf32, #tpu.memory_space<vmem>>, %arg7: memref<1x128xf32, #tpu.memory_space<vmem>>, %arg8: memref<16x128xf32, #tpu.memory_space<vmem>>) attributes {dimension_semantics = [#tpu.dimension_semantics<parallel>], iteration_bounds = array<i64: 2>, scalar_prefetch = 0 : i64, scratch_operands = 0 : i64, tpu.core_type = #tpu.core_type<tc>, window_params = [{transform_indices = @transform_0, window_bounds = array<i64: 16, 6>}, {pipeline_mode = #tpu.pipeline_mode<synchronous>, transform_indices = @transform_1, window_bounds = array<i64: 6, 128>}, {pipeline_mode = #tpu.pipeline_mode<synchronous>, transform_indices = @transform_2, window_bounds = array<i64: 1, 128>}, {pipeline_mode = #tpu.pipeline_mode<synchronous>, transform_indices = @transform_3, window_bounds = array<i64: 128, 128>}, {pipeline_mode = #tpu.pipeline_mode<synchronous>, transform_indices = @transform_4, window_bounds = array<i64: 1, 128>}, {pipeline_mode = #tpu.pipeline_mode<synchronous>, transform_indices = @transform_5, window_bounds = array<i64: 128, 128>}, {pipeline_mode = #tpu.pipeline_mode<synchronous>, transform_indices = @transform_6, window_bounds = array<i64: 1, 128>}, {transform_indices = @transform_7, window_bounds = array<i64: 16, 128>}]} {
    %c0 = arith.constant 0 : index
    %c0_0 = arith.constant 0 : index
    %0 = vector.load %arg1[%c0, %c0_0] : memref<16x6xf32, #tpu.memory_space<vmem>>, vector<16x6xf32>
    %c0_1 = arith.constant 0 : index
    %c0_2 = arith.constant 0 : index
    %1 = vector.load %arg2[%c0_1, %c0_2] : memref<6x128xf32, #tpu.memory_space<vmem>>, vector<6x128xf32>
    %cst = arith.constant dense<0.000000e+00> : vector<16x128xf32>
    %2 = tpu.matmul %0, %1, %cst {dimension_numbers = #tpu.dot_dimension_numbers<[1], [0], [0], [1], [0, 0, 1, 1], [], []>} : vector<16x6xf32>, vector<6x128xf32>, vector<16x128xf32> -> vector<16x128xf32>
    %c0_3 = arith.constant 0 : index
    %c0_4 = arith.constant 0 : index
    %3 = vector.load %arg3[%c0_3, %c0_4] : memref<1x128xf32, #tpu.memory_space<vmem>>, vector<1x128xf32>
    %4 = vector.broadcast %3 : vector<1x128xf32> to vector<16x128xf32>
    %5 = arith.addf %2, %4 : vector<16x128xf32>
    %cst_5 = arith.constant 0.000000e+00 : f32
    %6 = vector.broadcast %cst_5 : f32 to vector<16x128xf32>
    %7 = arith.maximumf %5, %6 : vector<16x128xf32>
    %c0_6 = arith.constant 0 : index
    %c0_7 = arith.constant 0 : index
    %8 = vector.load %arg4[%c0_6, %c0_7] : memref<128x128xf32, #tpu.memory_space<vmem>>, vector<128x128xf32>
    %cst_8 = arith.constant dense<0.000000e+00> : vector<16x128xf32>
    %9 = tpu.matmul %7, %8, %cst_8 {dimension_numbers = #tpu.dot_dimension_numbers<[1], [0], [0], [1], [0, 0, 1, 1], [], []>} : vector<16x128xf32>, vector<128x128xf32>, vector<16x128xf32> -> vector<16x128xf32>
    %c0_9 = arith.constant 0 : index
    %c0_10 = arith.constant 0 : index
    %10 = vector.load %arg5[%c0_9, %c0_10] : memref<1x128xf32, #tpu.memory_space<vmem>>, vector<1x128xf32>
    %11 = vector.broadcast %10 : vector<1x128xf32> to vector<16x128xf32>
    %12 = arith.addf %9, %11 : vector<16x128xf32>
    %cst_11 = arith.constant 0.000000e+00 : f32
    %13 = vector.broadcast %cst_11 : f32 to vector<16x128xf32>
    %14 = arith.maximumf %12, %13 : vector<16x128xf32>
    %c0_12 = arith.constant 0 : index
    %c0_13 = arith.constant 0 : index
    %15 = vector.load %arg6[%c0_12, %c0_13] : memref<128x128xf32, #tpu.memory_space<vmem>>, vector<128x128xf32>
    %cst_14 = arith.constant dense<0.000000e+00> : vector<16x128xf32>
    %16 = tpu.matmul %14, %15, %cst_14 {dimension_numbers = #tpu.dot_dimension_numbers<[1], [0], [0], [1], [0, 0, 1, 1], [], []>} : vector<16x128xf32>, vector<128x128xf32>, vector<16x128xf32> -> vector<16x128xf32>
    %c0_15 = arith.constant 0 : index
    %c0_16 = arith.constant 0 : index
    %17 = vector.load %arg7[%c0_15, %c0_16] : memref<1x128xf32, #tpu.memory_space<vmem>>, vector<1x128xf32>
    %18 = vector.broadcast %17 : vector<1x128xf32> to vector<16x128xf32>
    %19 = arith.addf %16, %18 : vector<16x128xf32>
    %c0_17 = arith.constant 0 : index
    %c0_18 = arith.constant 0 : index
    %20 = vector.load %arg8[%c0_17, %c0_18] : memref<16x128xf32, #tpu.memory_space<vmem>>, vector<16x128xf32>
    tpu.vector_store %arg8[%c0_17, %c0_18], %19 {strides = array<i32>} : memref<16x128xf32, #tpu.memory_space<vmem>>, vector<16x128xf32>,
    return
  }
  func.func @transform_0(%arg0: i32) -> (i32, i32) {
    %c0_i32 = arith.constant 0 : i32
    %c0_i32_0 = arith.constant 0 : i32
    return %arg0, %c0_i32 : i32, i32
  }
  func.func @transform_1(%arg0: i32) -> (i32, i32) {
    %c0_i32 = arith.constant 0 : i32
    %c0_i32_0 = arith.constant 0 : i32
    %c0_i32_1 = arith.constant 0 : i32
    return %c0_i32, %c0_i32_0 : i32, i32
  }
  func.func @transform_2(%arg0: i32) -> (i32, i32) {
    %c0_i32 = arith.constant 0 : i32
    %c0_i32_0 = arith.constant 0 : i32
    %c0_i32_1 = arith.constant 0 : i32
    return %c0_i32, %c0_i32_0 : i32, i32
  }
  func.func @transform_3(%arg0: i32) -> (i32, i32) {
    %c0_i32 = arith.constant 0 : i32
    %c0_i32_0 = arith.constant 0 : i32
    %c0_i32_1 = arith.constant 0 : i32
    return %c0_i32, %c0_i32_0 : i32, i32
  }
  func.func @transform_4(%arg0: i32) -> (i32, i32) {
    %c0_i32 = arith.constant 0 : i32
    %c0_i32_0 = arith.constant 0 : i32
    %c0_i32_1 = arith.constant 0 : i32
    return %c0_i32, %c0_i32_0 : i32, i32
  }
  func.func @transform_5(%arg0: i32) -> (i32, i32) {
    %c0_i32 = arith.constant 0 : i32
    %c0_i32_0 = arith.constant 0 : i32
    %c0_i32_1 = arith.constant 0 : i32
    return %c0_i32, %c0_i32_0 : i32, i32
  }
  func.func @transform_6(%arg0: i32) -> (i32, i32) {
    %c0_i32 = arith.constant 0 : i32
    %c0_i32_0 = arith.constant 0 : i32
    %c0_i32_1 = arith.constant 0 : i32
    return %c0_i32, %c0_i32_0 : i32, i32
  }
  func.func @transform_7(%arg0: i32) -> (i32, i32) {
    %c0_i32 = arith.constant 0 : i32
    %c0_i32_0 = arith.constant 0 : i32
    return %arg0, %c0_i32 : i32, i32
  }
}

</mosaic_0001>

<llo_original>
// kernel: tpu_custom_call.1
$region0: #{tpu_custom_call.1}
  #allocation0 [shape = 'u32[]', space=smem, size = 0x4, offset = 0x4, fixed_abs, tag = 'smem constant byte address 0x4 - core index']
  #allocation1 [shape = 'u32[72,128]{1,0:T(1,128)}', space=vmem, size = 0x9000, scoped, tag = 'internal scratch']
  %s0 = inlined_call_operand.vmem [shape: f32[32,6], index: 0, kind: input, shape index: {}]
  %s1 = inlined_call_operand.vmem [shape: f32[6,128], index: 1, kind: input, shape index: {}]
  %s2 = inlined_call_operand.vmem [shape: f32[1,128], index: 2, kind: input, shape index: {}]
  %s3 = inlined_call_operand.hbm [shape: f32[128,128], index: 3, kind: input, shape index: {}]
  %s4 = inlined_call_operand.vmem [shape: f32[1,128], index: 4, kind: input, shape index: {}]
  %s5 = inlined_call_operand.hbm [shape: f32[128,128], index: 5, kind: input, shape index: {}]
  %s6 = inlined_call_operand.vmem [shape: f32[1,128], index: 6, kind: input, shape index: {}]
  %s7 = inlined_call_operand.hbm [shape: f32[32,128], index: 7, kind: output, shape index: {}]
  %s8 = sld [smem:[#allocation0]]
  $region69: #{tpu_custom_call.1} parent=0
    _
  %s10 = ssub.s32 1, %s8
  %s11 = scalar_select 0, %s10, %s8
  $region1: #{tpu_custom_call.1} parent=0
    #allocation2 [shape = 'u8[65536]{0}', space=vmem, size = 0x10000, scoped, tag = 'input window, operand 3, single buffered']
    #allocation3 [shape = 's32[2]{0}', space=sflag, size = 0x8, scoped, tag = 'scoped memory for tpu_custom_call.1']
    #allocation4 [shape = 's32[2]{0}', space=sflag, size = 0x8, scoped, tag = 'scoped memory for tpu_custom_call.1']
    #allocation5 [shape = 'u8[65536]{0}', space=vmem, size = 0x10000, scoped, tag = 'input window, operand 5, single buffered']
    #allocation6 [shape = 's32[1]{0}', space=sflag, size = 0x4, scoped, tag = 'scoped memory for tpu_custom_call.1']
    #allocation7 [shape = 'u8[16384]{0}', space=vmem, size = 0x4000, scoped, tag = 'output window, operand 0']
    %12 = vsyncpa [#allocation3], 0
    %13 = vsyncpa [#allocation6], 0
    %14 = vsyncpa [#allocation4], 0
    %s15 = scalar_lea.sflag [#allocation4], 1
    %16 = vsyncpa %s15, 0
    loop: start=0, step=1, limit=4
    $region2: #{tpu_custom_call.1} parent=1 // loop_pre_header
      _
    $region3: #{tpu_custom_call.1} parent=1 // loop_header
      %s18 = sphi 0, %s22
      %p19 = scmp.ge.s32.totalorder %s18, 4
      %s28 = sphi 0, %s30
      %s31 = sphi 0, %s28
      %s32 = sphi 0, %s31
      %s48 = sphi 0, %s32
      %s52 = sphi 0, %s52
      %s54 = sphi 0, %s52
      %s55 = sphi 0, %s54
      %s69 = sphi 0, %s55
      %s73 = sphi 0, %s73
      %s75 = sphi 0, %s73
      %s76 = sphi 0, %s75
      %s90 = sphi 0, %s76
      %s94 = sphi 0, %s94
      %s96 = sphi 0, %s94
      %s97 = sphi 0, %s96
      %s111 = sphi 0, %s97
      %s115 = sphi 0, %s115
      %s117 = sphi 0, %s115
      %s118 = sphi 0, %s117
      %s132 = sphi 0, %s118
      %s136 = sphi 0, %s136
      %s138 = sphi 0, %s136
      %s139 = sphi 0, %s138
      %s153 = sphi 0, %s139
      %s157 = sphi 0, %s157
      %s159 = sphi 0, %s157
      %s160 = sphi 0, %s159
      %s174 = sphi 0, %s160
      %s180 = sphi 0, %s182
      %s183 = sphi 0, %s180
      %s184 = sphi 0, %s183
      %s200 = sphi 0, %s184
    $region4: #{tpu_custom_call.1} parent=1 // loop_header_branch
      %21 = sbr.rel (%p19) target = $region8
    $region5: #{tpu_custom_call.1} parent=1 // loop_body
      %s23 = ssub.s32 %s18, 1
      %s24 = ssub.s32 %s18, 2
      %s25 = sadd.s32 %s18, 1
      %s26 = ssub.s32 %s18, %s25
      %p27 = scmp.eq.s32.totalorder %s26, 0
      %s29 = sadd.s32 %s28, 1
      %s30 = scalar_select %p27, %s28, %s29
      %p33 = pneg %p27
      %p34 = scmp.eq.s32.totalorder %s18, 1
      %p35 = por %p33, %p34
      %p36 = scmp.ne.s32.totalorder %s28, %s31
      %p37 = scmp.eq.s32.totalorder %s18, 0
      %p38 = por %p36, %p37
      %p39 = scmp.ne.s32.totalorder %s28, %s31
      %p40 = scmp.eq.s32.totalorder %s23, 1
      %p41 = por %p39, %p40
      %p42 = scmp.ne.s32.totalorder %s31, %s32
      %p43 = scmp.eq.s32.totalorder %s23, 0
      %p44 = por %p42, %p43
      %p45 = scmp.ne.s32.totalorder %s31, %s32
      %p46 = scmp.eq.s32.totalorder %s24, 1
      %p47 = por %p45, %p46
      %p49 = scmp.ne.s32.totalorder %s32, %s48
      %p50 = scmp.eq.s32.totalorder %s24, 0
      %p51 = por %p49, %p50
      %s53 = sadd.s32 %s52, 1
      %p56 = scmp.eq.s32.totalorder %s18, 1
      %p57 = scmp.ne.s32.totalorder %s52, %s54
      %p58 = scmp.eq.s32.totalorder %s18, 0
      %p59 = por %p57, %p58
      %p60 = scmp.ne.s32.totalorder %s52, %s54
      %p61 = scmp.eq.s32.totalorder %s23, 1
      %p62 = por %p60, %p61
      %p63 = scmp.ne.s32.totalorder %s54, %s55
      %p64 = scmp.eq.s32.totalorder %s23, 0
      %p65 = por %p63, %p64
      %p66 = scmp.ne.s32.totalorder %s54, %s55
      %p67 = scmp.eq.s32.totalorder %s24, 1
      %p68 = por %p66, %p67
      %p70 = scmp.ne.s32.totalorder %s55, %s69
      %p71 = scmp.eq.s32.totalorder %s24, 0
      %p72 = por %p70, %p71
      %s74 = sadd.s32 %s73, 1
      %p77 = scmp.eq.s32.totalorder %s18, 1
      %p78 = scmp.ne.s32.totalorder %s73, %s75
      %p79 = scmp.eq.s32.totalorder %s18, 0
      %p80 = por %p78, %p79
      %p81 = scmp.ne.s32.totalorder %s73, %s75
      %p82 = scmp.eq.s32.totalorder %s23, 1
      %p83 = por %p81, %p82
      %p84 = scmp.ne.s32.totalorder %s75, %s76
      %p85 = scmp.eq.s32.totalorder %s23, 0
      %p86 = por %p84, %p85
      %p87 = scmp.ne.s32.totalorder %s75, %s76
      %p88 = scmp.eq.s32.totalorder %s24, 1
      %p89 = por %p87, %p88
      %p91 = scmp.ne.s32.totalorder %s76, %s90
      %p92 = scmp.eq.s32.totalorder %s24, 0
      %p93 = por %p91, %p92
      %s95 = sadd.s32 %s94, 1
      %p98 = scmp.eq.s32.totalorder %s18, 1
      %p99 = scmp.ne.s32.totalorder %s94, %s96
      %p100 = scmp.eq.s32.totalorder %s18, 0
      %p101 = por %p99, %p100
      %p102 = scmp.ne.s32.totalorder %s94, %s96
      %p103 = scmp.eq.s32.totalorder %s23, 1
      %p104 = por %p102, %p103
      %p105 = scmp.ne.s32.totalorder %s96, %s97
      %p106 = scmp.eq.s32.totalorder %s23, 0
      %p107 = por %p105, %p106
      %p108 = scmp.ne.s32.totalorder %s96, %s97
      %p109 = scmp.eq.s32.totalorder %s24, 1
      %p110 = por %p108, %p109
      %p112 = scmp.ne.s32.totalorder %s97, %s111
      %p113 = scmp.eq.s32.totalorder %s24, 0
      %p114 = por %p112, %p113
      %s116 = sadd.s32 %s115, 1
      %p119 = scmp.eq.s32.totalorder %s18, 1
      %p120 = scmp.ne.s32.totalorder %s115, %s117
      %p121 = scmp.eq.s32.totalorder %s18, 0
      %p122 = por %p120, %p121
      %p123 = scmp.ne.s32.totalorder %s115, %s117
      %p124 = scmp.eq.s32.totalorder %s23, 1
      %p125 = por %p123, %p124
      %p126 = scmp.ne.s32.totalorder %s117, %s118
      %p127 = scmp.eq.s32.totalorder %s23, 0
      %p128 = por %p126, %p127
      %p129 = scmp.ne.s32.totalorder %s117, %s118
      %p130 = scmp.eq.s32.totalorder %s24, 1
      %p131 = por %p129, %p130
      %p133 = scmp.ne.s32.totalorder %s118, %s132
      %p134 = scmp.eq.s32.totalorder %s24, 0
      %p135 = por %p133, %p134
      %s137 = sadd.s32 %s136, 1
      %p140 = scmp.eq.s32.totalorder %s18, 1
      %p141 = scmp.ne.s32.totalorder %s136, %s138
      %p142 = scmp.eq.s32.totalorder %s18, 0
      %p143 = por %p141, %p142
      %p144 = scmp.ne.s32.totalorder %s136, %s138
      %p145 = scmp.eq.s32.totalorder %s23, 1
      %p146 = por %p144, %p145
      %p147 = scmp.ne.s32.totalorder %s138, %s139
      %p148 = scmp.eq.s32.totalorder %s23, 0
      %p149 = por %p147, %p148
      %p150 = scmp.ne.s32.totalorder %s138, %s139
      %p151 = scmp.eq.s32.totalorder %s24, 1
      %p152 = por %p150, %p151
      %p154 = scmp.ne.s32.totalorder %s139, %s153
      %p155 = scmp.eq.s32.totalorder %s24, 0
      %p156 = por %p154, %p155
      %s158 = sadd.s32 %s157, 1
      %p161 = scmp.eq.s32.totalorder %s18, 1
      %p162 = scmp.ne.s32.totalorder %s157, %s159
      %p163 = scmp.eq.s32.totalorder %s18, 0
      %p164 = por %p162, %p163
      %p165 = scmp.ne.s32.totalorder %s157, %s159
      %p166 = scmp.eq.s32.totalorder %s23, 1
      %p167 = por %p165, %p166
      %p168 = scmp.ne.s32.totalorder %s159, %s160
      %p169 = scmp.eq.s32.totalorder %s23, 0
      %p170 = por %p168, %p169
      %p171 = scmp.ne.s32.totalorder %s159, %s160
      %p172 = scmp.eq.s32.totalorder %s24, 1
      %p173 = por %p171, %p172
      %p175 = scmp.ne.s32.totalorder %s160, %s174
      %p176 = scmp.eq.s32.totalorder %s24, 0
      %p177 = por %p175, %p176
      %s178 = ssub.s32 %s18, %s25
      %p179 = scmp.eq.s32.totalorder %s178, 0
      %s181 = sadd.s32 %s180, 1
      %s182 = scalar_select %p179, %s180, %s181
      %p185 = pneg %p179
      %p186 = scmp.eq.s32.totalorder %s18, 1
      %p187 = por %p185, %p186
      %p188 = scmp.ne.s32.totalorder %s180, %s183
      %p189 = scmp.eq.s32.totalorder %s18, 0
      %p190 = por %p188, %p189
      %p191 = scmp.ne.s32.totalorder %s180, %s183
      %p192 = scmp.eq.s32.totalorder %s23, 1
      %p193 = por %p191, %p192
      %p194 = scmp.ne.s32.totalorder %s183, %s184
      %p195 = scmp.eq.s32.totalorder %s23, 0
      %p196 = por %p194, %p195
      %p197 = scmp.ne.s32.totalorder %s183, %s184
      %p198 = scmp.eq.s32.totalorder %s24, 1
      %p199 = por %p197, %p198
      %p201 = scmp.ne.s32.totalorder %s184, %s200
      %p202 = scmp.eq.s32.totalorder %s24, 0
      %p203 = por %p201, %p202
      %p204 = scmp.le.s32.totalorder 1, %s18
      %p205 = scmp.lt.s32.totalorder %s18, 3
      %p206 = pnand %p204, %p205
      %p207 = pneg %p206
      // Predicated region
      $region9: #{tpu_custom_call.1} parent=5 // pred_check
        _
      $region10: #{tpu_custom_call.1} parent=5 // pred_check_branch
        %209 = sbr.rel (%p206) target = $region12
      $region11: #{tpu_custom_call.1} parent=5 // pred_region
        %s210 = ssub.s32 %s18, 1
        // Predicated region
        $region13: #{tpu_custom_call.1} parent=11 // pred_check
          %p211 = pneg %p65
        $region14: #{tpu_custom_call.1} parent=11 // pred_check_branch
          %213 = sbr.rel (%p211) target = $region16
        $region15: #{tpu_custom_call.1} parent=11 // pred_region
          _
        $region16: #{tpu_custom_call.1} parent=11 // pred_fallthru
          _
        // Predicated region
        $region17: #{tpu_custom_call.1} parent=11 // pred_check
          %p214 = pneg %p86
        $region18: #{tpu_custom_call.1} parent=11 // pred_check_branch
          %216 = sbr.rel (%p214) target = $region20
        $region19: #{tpu_custom_call.1} parent=11 // pred_region
          _
        $region20: #{tpu_custom_call.1} parent=11 // pred_fallthru
          _
        // Predicated region
        $region21: #{tpu_custom_call.1} parent=11 // pred_check
          %p217 = pneg %p107
        $region22: #{tpu_custom_call.1} parent=11 // pred_check_branch
          %219 = sbr.rel (%p217) target = $region24
        $region23: #{tpu_custom_call.1} parent=11 // pred_region
          %221 = vsyncadd [#allocation3], 0
          %s222 = sshll.u32 %s3, 4
          %s223 = int_to_ptr.hbm [resolvable:$true] %s222
          %s224 = sshll.u32 [#allocation2], 4
          %s225 = int_to_ptr.vmem [resolvable:$true] %s224
          %230 = dma.hbm_to_vmem [thread:$0]  %s223, 2048, %s225, [#allocation3], 128, 128, 8
        $region24: #{tpu_custom_call.1} parent=11 // pred_fallthru
          _
        // Predicated region
        $region25: #{tpu_custom_call.1} parent=11 // pred_check
          %p231 = pneg %p128
        $region26: #{tpu_custom_call.1} parent=11 // pred_check_branch
          %233 = sbr.rel (%p231) target = $region28
        $region27: #{tpu_custom_call.1} parent=11 // pred_region
          _
        $region28: #{tpu_custom_call.1} parent=11 // pred_fallthru
          _
        // Predicated region
        $region29: #{tpu_custom_call.1} parent=11 // pred_check
          %p234 = pneg %p149
        $region30: #{tpu_custom_call.1} parent=11 // pred_check_branch
          %236 = sbr.rel (%p234) target = $region32
        $region31: #{tpu_custom_call.1} parent=11 // pred_region
          %238 = vsyncadd [#allocation6], 0
          %s239 = sshll.u32 %s5, 4
          %s240 = int_to_ptr.hbm [resolvable:$true] %s239
          %s241 = sshll.u32 [#allocation5], 4
          %s242 = int_to_ptr.vmem [resolvable:$true] %s241
          %247 = dma.hbm_to_vmem [thread:$0]  %s240, 2048, %s242, [#allocation6], 128, 128, 8
        $region32: #{tpu_custom_call.1} parent=11 // pred_fallthru
          _
        // Predicated region
        $region33: #{tpu_custom_call.1} parent=11 // pred_check
          %p248 = pneg %p170
        $region34: #{tpu_custom_call.1} parent=11 // pred_check_branch
          %250 = sbr.rel (%p248) target = $region36
        $region35: #{tpu_custom_call.1} parent=11 // pred_region
          _
        $region36: #{tpu_custom_call.1} parent=11 // pred_fallthru
          _
      $region12: #{tpu_custom_call.1} parent=5 // pred_fallthru
        _
      %p251 = scmp.lt.s32.totalorder %s18, 2
      // Predicated region
      $region37: #{tpu_custom_call.1} parent=5 // pred_check
        %p252 = pneg %p251
      $region38: #{tpu_custom_call.1} parent=5 // pred_check_branch
        %254 = sbr.rel (%p252) target = $region40
      $region39: #{tpu_custom_call.1} parent=5 // pred_region
        // Predicated region
        $region41: #{tpu_custom_call.1} parent=39 // pred_check
          %p255 = pneg %p38
        $region42: #{tpu_custom_call.1} parent=39 // pred_check_branch
          %257 = sbr.rel (%p255) target = $region44
        $region43: #{tpu_custom_call.1} parent=39 // pred_region
          %s258 = smul.u32 2, %s18
          %p259 = scmp.lt.s32.totalorder %s258, 3
          %s260 = scalar_select %p259, %s258, 3
          %s261 = smul.addr %s260, 8
          %s262 = scalar_lea.vmem %s0, %s261
          %s263 = smul.u32 2, %s18
        $region44: #{tpu_custom_call.1} parent=39 // pred_fallthru
          _
      $region40: #{tpu_custom_call.1} parent=5 // pred_fallthru
        _
      %p264 = scmp.le.s32.totalorder 1, %s18
      %p265 = scmp.lt.s32.totalorder %s18, 3
      %p266 = pnand %p264, %p265
      %p267 = pneg %p266
      // Predicated region
      $region45: #{tpu_custom_call.1} parent=5 // pred_check
        _
      $region46: #{tpu_custom_call.1} parent=5 // pred_check_branch
        %269 = sbr.rel (%p266) target = $region48
      $region47: #{tpu_custom_call.1} parent=5 // pred_region
        %s270 = ssub.s32 %s18, 1
        // Predicated region
        $region49: #{tpu_custom_call.1} parent=47 // pred_check
          %p271 = pneg %p107
        $region50: #{tpu_custom_call.1} parent=47 // pred_check_branch
          %273 = sbr.rel (%p271) target = $region52
        $region51: #{tpu_custom_call.1} parent=47 // pred_region
          %275 = dma.done [#allocation3], 2048
        $region52: #{tpu_custom_call.1} parent=47 // pred_fallthru
          _
        // Predicated region
        $region53: #{tpu_custom_call.1} parent=47 // pred_check
          %p276 = pneg %p149
        $region54: #{tpu_custom_call.1} parent=47 // pred_check_branch
          %278 = sbr.rel (%p276) target = $region56
        $region55: #{tpu_custom_call.1} parent=47 // pred_region
          %280 = dma.done [#allocation6], 2048
        $region56: #{tpu_custom_call.1} parent=47 // pred_fallthru
          _
        %s281 = smul.u32 2, %s23
        %p282 = scmp.lt.s32.totalorder %s281, 3
        %s283 = scalar_select %p282, %s281, 3
        %s284 = smul.addr %s283, 8
        %s285 = scalar_lea.vmem %s0, %s284
        %p286 = pneg %p44
        %p287 = pneg %p41
        %p288 = pneg %p65
        %p289 = pneg %p62
        %p290 = pneg %p86
        %p291 = pneg %p83
        %p292 = pneg %p107
        %p293 = pneg %p104
        %p294 = pneg %p128
        %p295 = pneg %p125
        %p296 = pneg %p149
        %p297 = pneg %p146
        %p298 = pneg %p170
        %p299 = pneg %p167
        %p300 = pneg %p196
        %p301 = pneg %p193
        %s302 = sand.u32 %s183, 1
        %s303 = scalar_lea.sflag [#allocation4], %s302
        %s304 = sand.u32 %s183, 1
        %s305 = smul.addr %s304, 16
        %s306 = scalar_lea.vmem [#allocation7], %s305
        %s307 = smul.u32 2, %s23
        %p308 = scmp.lt.s32.totalorder %s307, 3
        %s309 = scalar_select %p308, %s307, 3
        %s310 = smul.addr %s309, 8
        %s311 = scalar_lea.vmem %s0, %s310
        %s312 = smul.u32 2, %s23
        %s313 = smul.u32 2, %s23
        %v314 = vld [vmem:[%s311] sm:$0xff]
        %v315 = vld [vmem:[%s311 + $0x8] sm:$0xff]
        %v316 = vld [vmem:[%s1] sm:$0x3f]
        %v317 = vld [vmem:[%s2] sm:$0x1]
        %v319 = vperm.slane %v317, 0
        %vm321 = vcmask 48128
        %v323 = vsel %vm321, %v314, 0
        %v326 = vsel %vm321, %v315, 0
        %vm328 = vcmask 1045504
        %v330 = vsel %vm328, %v316, 0
        %332 = vmatpush.msra.mxu0 0.0
        %333 = vmatpush.msra.mxu0 0.0
        %334 = vmatpush.msra.mxu0 0.0
        %335 = vmatpush.msra.mxu0 0.0
        %336 = vmatpush.msra.mxu0 0.0
        %337 = vmatpush.msra.mxu0 0.0
        %338 = vmatpush.msra.mxu0 0.0
        %339 = vmatpush.msra.mxu0 0.0
        %340 = vmatpush.msra.mxu0 0.0
        %341 = vmatpush.msra.mxu0 0.0
        %342 = vmatpush.msra.mxu0 0.0
        %343 = vmatpush.msra.mxu0 0.0
        %344 = vmatpush.msra.mxu0 0.0
        %345 = vmatpush.msra.mxu0 0.0
        %346 = vmatpush.msra.mxu0 0.0
        %347 = vmatpush.msra.mxu0 %v330
        %348 = vmatmul.f32.gmra.mxu0 %v323
        %v349 = vpop.f32.mrf.mxu0
        %v350 = vadd.f32 %v319, %v349
        %351 = vmatmul.f32.gmra.mxu0 %v326
        %v352 = vpop.f32.mrf.mxu0
        %v353 = vadd.f32 %v319, %v352
        %354 = vdwg.mxu0
        %v355 = vmax.f32 %v350, 0.0
        %v356 = vmax.f32 %v353, 0.0
        %v357 = vld [vmem:[#allocation2] sm:$0xff]
        %v358 = vld [vmem:[#allocation2 + $0x8] sm:$0xff]
        %v359 = vld [vmem:[#allocation2 + $0x10] sm:$0xff]
        %v360 = vld [vmem:[#allocation2 + $0x18] sm:$0xff]
        %v361 = vld [vmem:[#allocation2 + $0x20] sm:$0xff]
        %v362 = vld [vmem:[#allocation2 + $0x28] sm:$0xff]
        %v363 = vld [vmem:[#allocation2 + $0x30] sm:$0xff]
        %v364 = vld [vmem:[#allocation2 + $0x38] sm:$0xff]
        %v365 = vld [vmem:[#allocation2 + $0x40] sm:$0xff]
        %v366 = vld [vmem:[#allocation2 + $0x48] sm:$0xff]
        %v367 = vld [vmem:[#allocation2 + $0x50] sm:$0xff]
        %v368 = vld [vmem:[#allocation2 + $0x58] sm:$0xff]
        %v369 = vld [vmem:[#allocation2 + $0x60] sm:$0xff]
        %v370 = vld [vmem:[#allocation2 + $0x68] sm:$0xff]
        %v371 = vld [vmem:[#allocation2 + $0x70] sm:$0xff]
        %v372 = vld [vmem:[#allocation2 + $0x78] sm:$0xff]
        %v373 = vld [vmem:[%s4] sm:$0x1]
        %v375 = vperm.slane %v373, 0
        %377 = vmatpush.msra.mxu0 %v372
        %378 = vmatpush.msra.mxu0 %v371
        %379 = vmatpush.msra.mxu0 %v370
        %380 = vmatpush.msra.mxu0 %v369
        %381 = vmatpush.msra.mxu0 %v368
        %382 = vmatpush.msra.mxu0 %v367
        %383 = vmatpush.msra.mxu0 %v366
        %384 = vmatpush.msra.mxu0 %v365
        %385 = vmatpush.msra.mxu0 %v364
        %386 = vmatpush.msra.mxu0 %v363
        %387 = vmatpush.msra.mxu0 %v362
        %388 = vmatpush.msra.mxu0 %v361
        %389 = vmatpush.msra.mxu0 %v360
        %390 = vmatpush.msra.mxu0 %v359
        %391 = vmatpush.msra.mxu0 %v358
        %392 = vmatpush.msra.mxu0 %v357
        %393 = vmatmul.f32.gmra.mxu0 %v355
        %v394 = vpop.f32.mrf.mxu0
        %v395 = vadd.f32 %v375, %v394
        %396 = vmatmul.f32.gmra.mxu0 %v356
        %v397 = vpop.f32.mrf.mxu0
        %v398 = vadd.f32 %v375, %v397
        %399 = vdwg.mxu0
        %v400 = vmax.f32 %v395, 0.0
        %v401 = vmax.f32 %v398, 0.0
        %v402 = vld [vmem:[#allocation5] sm:$0xff]
        %v403 = vld [vmem:[#allocation5 + $0x8] sm:$0xff]
        %v404 = vld [vmem:[#allocation5 + $0x10] sm:$0xff]
        %v405 = vld [vmem:[#allocation5 + $0x18] sm:$0xff]
        %v406 = vld [vmem:[#allocation5 + $0x20] sm:$0xff]
        %v407 = vld [vmem:[#allocation5 + $0x28] sm:$0xff]
        %v408 = vld [vmem:[#allocation5 + $0x30] sm:$0xff]
        %v409 = vld [vmem:[#allocation5 + $0x38] sm:$0xff]
        %v410 = vld [vmem:[#allocation5 + $0x40] sm:$0xff]
        %v411 = vld [vmem:[#allocation5 + $0x48] sm:$0xff]
        %v412 = vld [vmem:[#allocation5 + $0x50] sm:$0xff]
        %v413 = vld [vmem:[#allocation5 + $0x58] sm:$0xff]
        %v414 = vld [vmem:[#allocation5 + $0x60] sm:$0xff]
        %v415 = vld [vmem:[#allocation5 + $0x68] sm:$0xff]
        %v416 = vld [vmem:[#allocation5 + $0x70] sm:$0xff]
        %v417 = vld [vmem:[#allocation5 + $0x78] sm:$0xff]
        %v418 = vld [vmem:[%s6] sm:$0x1]
        %v420 = vperm.slane %v418, 0
        %422 = vmatpush.msra.mxu0 %v417
        %423 = vmatpush.msra.mxu0 %v416
        %424 = vmatpush.msra.mxu0 %v415
        %425 = vmatpush.msra.mxu0 %v414
        %426 = vmatpush.msra.mxu0 %v413
        %427 = vmatpush.msra.mxu0 %v412
        %428 = vmatpush.msra.mxu0 %v411
        %429 = vmatpush.msra.mxu0 %v410
        %430 = vmatpush.msra.mxu0 %v409
        %431 = vmatpush.msra.mxu0 %v408
        %432 = vmatpush.msra.mxu0 %v407
        %433 = vmatpush.msra.mxu0 %v406
        %434 = vmatpush.msra.mxu0 %v405
        %435 = vmatpush.msra.mxu0 %v404
        %436 = vmatpush.msra.mxu0 %v403
        %437 = vmatpush.msra.mxu0 %v402
        %438 = vmatmul.f32.gmra.mxu0 %v400
        %v439 = vpop.f32.mrf.mxu0
        %v440 = vadd.f32 %v420, %v439
        %441 = vmatmul.f32.gmra.mxu0 %v401
        %v442 = vpop.f32.mrf.mxu0
        %v443 = vadd.f32 %v420, %v442
        %444 = vdwg.mxu0
        %445 = vst [vmem:[%s306] sm:$0xff] %v440
        %446 = vst [vmem:[%s306 + $0x8] sm:$0xff] %v443
        %s447 = sand.u32 %s183, 1
        %s448 = scalar_lea.sflag [#allocation4], %s447
        %s449 = sand.u32 %s183, 1
        %s450 = smul.addr %s449, 16
        %s451 = scalar_lea.vmem [#allocation7], %s450
        // Predicated region
        $region57: #{tpu_custom_call.1} parent=47 // pred_check
          %p452 = pneg %p193
        $region58: #{tpu_custom_call.1} parent=47 // pred_check_branch
          %454 = sbr.rel (%p452) target = $region60
        $region59: #{tpu_custom_call.1} parent=47 // pred_region
          %s455 = smul.u32 2, %s23
          %457 = vsyncadd %s448, 0
          %s458 = smul.addr %s455, 8
          %s459 = scalar_lea.hbm %s7, %s458
          %s460 = sshll.u32 %s451, 4
          %s461 = int_to_ptr.vmem [resolvable:$true] %s460
          %s462 = sshll.u32 %s459, 4
          %s463 = int_to_ptr.hbm [resolvable:$true] %s462
          %468 = dma.vmem_to_hbm [thread:$0]  %s461, 256, %s463, %s448, 128, 128, 8
        $region60: #{tpu_custom_call.1} parent=47 // pred_fallthru
          _
      $region48: #{tpu_custom_call.1} parent=5 // pred_fallthru
        _
      %p469 = scmp.le.s32.totalorder 2, %s18
      // Predicated region
      $region61: #{tpu_custom_call.1} parent=5 // pred_check
        %p470 = pneg %p469
      $region62: #{tpu_custom_call.1} parent=5 // pred_check_branch
        %472 = sbr.rel (%p470) target = $region64
      $region63: #{tpu_custom_call.1} parent=5 // pred_region
        %s473 = ssub.s32 %s18, 2
        // Predicated region
        $region65: #{tpu_custom_call.1} parent=63 // pred_check
          %p474 = pneg %p199
        $region66: #{tpu_custom_call.1} parent=63 // pred_check_branch
          %476 = sbr.rel (%p474) target = $region68
        $region67: #{tpu_custom_call.1} parent=63 // pred_region
          %s477 = sand.u32 %s184, 1
          %s478 = scalar_lea.sflag [#allocation4], %s477
          %s479 = sand.u32 %s184, 1
          %s480 = smul.addr %s479, 16
          %s481 = scalar_lea.vmem [#allocation7], %s480
          %483 = dma.done %s478, 256
        $region68: #{tpu_custom_call.1} parent=63 // pred_fallthru
          _
      $region64: #{tpu_custom_call.1} parent=5 // pred_fallthru
        _
    $region6: #{tpu_custom_call.1} parent=1 // loop_footer
      %s22 = sadd.s32 1, %s18
    $region7: #{tpu_custom_call.1} parent=1 // loop_footer_branch
      %17 = sbr.rel target = $region3
    $region8: #{tpu_custom_call.1} parent=1 // loop_exit
      _
    %484 = vsyncpa [#allocation3], 1
    %s485 = scalar_lea.sflag [#allocation3], 1
    %486 = vsyncpa %s485, 1
    %487 = vsyncpa [#allocation6], 1
    %488 = vsyncpa [#allocation4], 1
    %s489 = scalar_lea.sflag [#allocation4], 1
    %490 = vsyncpa %s489, 1

</llo_original>
